<compile_context>
chip_gen: v5e
topology: v5e:2x2
jax: 0.10.0
libtpu: 0.0.40
codegen_flags: <defaults>
</compile_context>

<pallas_src>
import math

import jax
import jax.numpy as jnp
from jax.experimental import pallas as pl
from jax.experimental.pallas import tpu as pltpu


def _blockdiag_matmul_kernel(g_ref, x_ref, o_ref):
    # g_ref: (L, L) block-diagonal dynamics map, x_ref/o_ref: (TR, L)
    o_ref[...] = jnp.dot(
        x_ref[...], g_ref[...], preferred_element_type=jnp.float32
    ).astype(o_ref.dtype)


def _round_up(a: int, b: int) -> int:
    return (a + b - 1) // b * b


def linear_dynamics_forward(
    state,
    F,
    Q,
    *,
    block_rows: int | None = None,
    target_block_bytes: int = 2 << 20,
):
    """Pallas implementation of LinearDynamicsModel.forward.

    Args:
      state: (N, D, K) batch of state columns.
      F:     (D, D) dynamics matrix.
      Q:     (D, D) process-noise covariance.

    Returns:
      pred     : (N, D, K) = F @ state (per batch element)
      jac_last : (N, D, D) = F broadcast over the batch
      Q_exp    : (N, D, D) = Q broadcast over the batch
    """
    N, D, K = state.shape
    assert F.shape == (D, D) and Q.shape == (D, D)

    out_dtype = jnp.result_type(state.dtype, F.dtype)
    dk = D * K
    # Smallest lane-dense super-block: L columns hold P whole state vectors.
    L = (dk * 128) // math.gcd(dk, 128)

    if L > 1024:
        # TODO(synk): very large dim_state*K has no small 128-aligned
        # super-block; fall back to XLA einsum for pred in that regime.
        pred = jnp.einsum(
            "ij,njk->nik", F.astype(out_dtype), state.astype(out_dtype)
        )
    else:
        P = L // dk
        itemsize = jnp.dtype(out_dtype).itemsize

        # Block-diagonal map G so that  y_row = x_row @ G  applies F to every
        # state vector packed in the row:  G = I_P (x) (F^T (x) I_K).
        g_small = F.T.astype(out_dtype)
        if K > 1:
            g_small = jnp.kron(g_small, jnp.eye(K, dtype=out_dtype))
        g = jnp.kron(jnp.eye(P, dtype=out_dtype), g_small)  # (L, L)

        # Free (layout-preserving) reshape of state into lane-dense rows.
        x_flat = state.astype(out_dtype).reshape(-1)
        m_total = N * dk
        R = pl.cdiv(m_total, L)
        padded = R * L != m_total
        if padded:
            # Only when N is not a multiple of P: pad < L trailing elements.
            x_flat = jnp.pad(x_flat, (0, R * L - m_total))
        x2d = x_flat.reshape(R, L)

        # Row-tile size: ~target_block_bytes per step, but keep >= 2 grid
        # steps when possible (v7x has 2 TensorCores) and respect the
        # (8, 128) block-shape rule.
        if block_rows is None:
            tr_target = max(8, (target_block_bytes // (L * itemsize)) // 8 * 8)
            tr_split = _round_up(pl.cdiv(R, 2), 8)
            tr = max(8, min(tr_target, tr_split))
        else:
            tr = block_rows
        if tr >= R:
            tr = R  # single full-extent block (legal for any R)
        else:
            tr = max(8, tr // 8 * 8)
        grid = (pl.cdiv(R, tr),)

        cost = pl.CostEstimate(
            flops=2 * R * L * L,
            transcendentals=0,
            bytes_accessed=(L * L + 2 * R * L) * itemsize,
        )

        y2d = pl.pallas_call(
            _blockdiag_matmul_kernel,
            out_shape=jax.ShapeDtypeStruct((R, L), out_dtype),
            grid_spec=pltpu.PrefetchScalarGridSpec(
                num_scalar_prefetch=0,
                grid=grid,
                in_specs=[
                    pl.BlockSpec((L, L), lambda i: (0, 0)),   # shared G
                    pl.BlockSpec((tr, L), lambda i: (i, 0)),  # state rows
                ],
                out_specs=pl.BlockSpec((tr, L), lambda i: (i, 0)),
            ),
            compiler_params=pltpu.CompilerParams(
                dimension_semantics=("parallel",),
            ),
            cost_estimate=cost,
        )(g, x2d)

        y_flat = y2d.reshape(-1)
        if padded:
            y_flat = y_flat[:m_total]
        pred = y_flat.reshape(N, D, K)

    # jac[..., -1] and Q.expand are pure parameter broadcasts: keep them out
    # of the kernel (zero compute, pure HBM writes) and let XLA fuse/elide.
    jac_last = jnp.broadcast_to(F, (N, D, D))
    q_exp = jnp.broadcast_to(Q, (N, D, D))
    return pred, jac_last, q_exp


if __name__ == "__main__":
    dim_state = 8
    key = jax.random.PRNGKey(0)
    k_f, k_q, k1, k2, k3, k4 = jax.random.split(key, 6)

    # Deterministic synthetic parameters (near-identity dynamics, SPD noise).
    F = jnp.eye(dim_state, dtype=jnp.float32) + 0.01 * jax.random.normal(
        k_f, (dim_state, dim_state), dtype=jnp.float32
    )
    A = 0.1 * jax.random.normal(k_q, (dim_state, dim_state), dtype=jnp.float32)
    Q = A @ A.T + 0.01 * jnp.eye(dim_state, dtype=jnp.float32)

    def check(state, **kw):
        N = state.shape[0]
        pred, jac_last, q_exp = linear_dynamics_forward(state, F, Q, **kw)
        jax.block_until_ready((pred, jac_last, q_exp))
        pred_ref = jnp.einsum("ij,njk->nik", F, state)
        assert pred.shape == state.shape
        assert jnp.allclose(pred, pred_ref, atol=1e-5, rtol=1e-5)
        assert jnp.allclose(jac_last, jnp.broadcast_to(F, (N, dim_state, dim_state)))
        assert jnp.allclose(q_exp, jnp.broadcast_to(Q, (N, dim_state, dim_state)))

    # 1) Small batch, K=1, single full-extent block.
    check(jax.random.normal(k1, (32, dim_state, 1), dtype=jnp.float32))

    # 2) Larger batch, K=1, multiple lane-dense tiles + ragged final tile
    #    (no jnp.pad: 2080*8 is a multiple of 128).
    check(
        jax.random.normal(k2, (2080, dim_state, 1), dtype=jnp.float32),
        block_rows=64,
    )

    # 3) Ragged batch (N*D*K not a multiple of 128) -> tiny tail pad path.
    check(jax.random.normal(k3, (50, dim_state, 1), dtype=jnp.float32))

    # 4) K > 1 path (state matrices instead of column vectors).
    check(jax.random.normal(k4, (40, dim_state, 2), dtype=jnp.float32))

    print("KERNEL_OK")
</pallas_src>

<mosaic_0001>
module attributes {stable_mosaic.version = 11 : i64} {
  func.func @_blockdiag_matmul_kernel(%arg0: i32, %arg1: memref<128x128xf32, #tpu.memory_space<vmem>>, %arg2: memref<2x128xf32, #tpu.memory_space<vmem>>, %arg3: memref<2x128xf32, #tpu.memory_space<vmem>>) attributes {dimension_semantics = [#tpu.dimension_semantics<parallel>], iteration_bounds = array<i64: 1>, scalar_prefetch = 0 : i64, scratch_operands = 0 : i64, tpu.core_type = #tpu.core_type<tc>, window_params = [{pipeline_mode = #tpu.pipeline_mode<synchronous>, transform_indices = @transform_0, window_bounds = array<i64: 128, 128>}, {transform_indices = @transform_1, window_bounds = array<i64: 2, 128>}, {transform_indices = @transform_2, window_bounds = array<i64: 2, 128>}]} {
    %c0 = arith.constant 0 : index
    %c0_0 = arith.constant 0 : index
    %0 = vector.load %arg2[%c0, %c0_0] : memref<2x128xf32, #tpu.memory_space<vmem>>, vector<2x128xf32>
    %c0_1 = arith.constant 0 : index
    %c0_2 = arith.constant 0 : index
    %1 = vector.load %arg1[%c0_1, %c0_2] : memref<128x128xf32, #tpu.memory_space<vmem>>, vector<128x128xf32>
    %cst = arith.constant dense<0.000000e+00> : vector<2x128xf32>
    %2 = tpu.matmul %0, %1, %cst {dimension_numbers = #tpu.dot_dimension_numbers<[1], [0], [0], [1], [0, 0, 1, 1], [], []>} : vector<2x128xf32>, vector<128x128xf32>, vector<2x128xf32> -> vector<2x128xf32>
    %c0_3 = arith.constant 0 : index
    %c0_4 = arith.constant 0 : index
    %3 = vector.load %arg3[%c0_3, %c0_4] : memref<2x128xf32, #tpu.memory_space<vmem>>, vector<2x128xf32>
    tpu.vector_store %arg3[%c0_3, %c0_4], %2 {strides = array<i32>} : memref<2x128xf32, #tpu.memory_space<vmem>>, vector<2x128xf32>,
    return
  }
  func.func @transform_0(%arg0: i32) -> (i32, i32) {
    %c0_i32 = arith.constant 0 : i32
    %c0_i32_0 = arith.constant 0 : i32
    %c0_i32_1 = arith.constant 0 : i32
    return %c0_i32, %c0_i32_0 : i32, i32
  }
  func.func @transform_1(%arg0: i32) -> (i32, i32) {
    %c0_i32 = arith.constant 0 : i32
    %c0_i32_0 = arith.constant 0 : i32
    return %arg0, %c0_i32 : i32, i32
  }
  func.func @transform_2(%arg0: i32) -> (i32, i32) {
    %c0_i32 = arith.constant 0 : i32
    %c0_i32_0 = arith.constant 0 : i32
    return %arg0, %c0_i32 : i32, i32
  }
}

</mosaic_0001>

<llo_original>
// kernel: tpu_custom_call.1
$region0: #{tpu_custom_call.1}
  #allocation0 [shape = 'u32[]', space=smem, size = 0x4, offset = 0x4, fixed_abs, tag = 'smem constant byte address 0x4 - core index']
  #allocation1 [shape = 'u32[72,128]{1,0:T(1,128)}', space=vmem, size = 0x9000, scoped, tag = 'internal scratch']
  %s0 = inlined_call_operand.hbm [shape: f32[128,128], index: 0, kind: input, shape index: {}]
  %s1 = inlined_call_operand.hbm [shape: f32[2,128], index: 1, kind: input, shape index: {}]
  %s2 = inlined_call_operand.hbm [shape: f32[2,128], index: 2, kind: output, shape index: {}]
  %s3 = sld [smem:[#allocation0]]
  $region26: #{tpu_custom_call.1} parent=0
    _
  %s5 = ssub.s32 1, %s3
  %s6 = scalar_select 0, %s5, %s3
  $region1: #{tpu_custom_call.1} parent=0
    #allocation2 [shape = 'u8[65536]{0}', space=vmem, size = 0x10000, scoped, tag = 'input window, operand 0, single buffered']
    #allocation3 [shape = 's32[1]{0}', space=sflag, size = 0x4, scoped, tag = 'scoped memory for tpu_custom_call.1']
    #allocation4 [shape = 's32[1]{0}', space=sflag, size = 0x4, scoped, tag = 'scoped memory for tpu_custom_call.1']
    #allocation5 [shape = 'u8[1024]{0}', space=vmem, size = 0x400, scoped, tag = 'input window, operand 1, single buffered']
    #allocation6 [shape = 's32[1]{0}', space=sflag, size = 0x4, scoped, tag = 'scoped memory for tpu_custom_call.1']
    #allocation7 [shape = 'u8[1024]{0}', space=vmem, size = 0x400, scoped, tag = 'output window, operand 0, single buffered']
    %7 = vsyncpa [#allocation3], 0
    %8 = vsyncpa [#allocation6], 0
    %9 = vsyncpa [#allocation4], 0
    // Predicated region
    $region2: #{tpu_custom_call.1} parent=1 // pred_check
      _
    $region3: #{tpu_custom_call.1} parent=1 // pred_check_branch
      %11 = sbr.rel (0) target = $region5
    $region4: #{tpu_custom_call.1} parent=1 // pred_region
      %13 = vsyncadd [#allocation3], 0
      %s14 = sshll.u32 %s0, 4
      %s15 = int_to_ptr.hbm [resolvable:$true] %s14
      %s16 = sshll.u32 [#allocation2], 4
      %s17 = int_to_ptr.vmem [resolvable:$true] %s16
      %22 = dma.hbm_to_vmem [thread:$0]  %s15, 2048, %s17, [#allocation3], 128, 128, 8
    $region5: #{tpu_custom_call.1} parent=1 // pred_fallthru
      _
    // Predicated region
    $region6: #{tpu_custom_call.1} parent=1 // pred_check
      _
    $region7: #{tpu_custom_call.1} parent=1 // pred_check_branch
      %24 = sbr.rel (0) target = $region9
    $region8: #{tpu_custom_call.1} parent=1 // pred_region
      %26 = vsyncadd [#allocation6], 0
      %s28 = sshll.u32 %s1, 4
      %s29 = int_to_ptr.hbm [resolvable:$true] %s28
      %s30 = sshll.u32 [#allocation5], 4
      %s31 = int_to_ptr.vmem [resolvable:$true] %s30
      %33 = dma.hbm_to_vmem [thread:$0]  %s29, 32, %s31, [#allocation6]
    $region9: #{tpu_custom_call.1} parent=1 // pred_fallthru
      _
    // Predicated region
    $region10: #{tpu_custom_call.1} parent=1 // pred_check
      _
    $region11: #{tpu_custom_call.1} parent=1 // pred_check_branch
      %35 = sbr.rel (0) target = $region13
    $region12: #{tpu_custom_call.1} parent=1 // pred_region
      %37 = dma.done [#allocation3], 2048
    $region13: #{tpu_custom_call.1} parent=1 // pred_fallthru
      _
    // Predicated region
    $region14: #{tpu_custom_call.1} parent=1 // pred_check
      _
    $region15: #{tpu_custom_call.1} parent=1 // pred_check_branch
      %39 = sbr.rel (0) target = $region17
    $region16: #{tpu_custom_call.1} parent=1 // pred_region
      %41 = dma.done [#allocation6], 32
    $region17: #{tpu_custom_call.1} parent=1 // pred_fallthru
      _
    %v42 = vld [vmem:[#allocation5] sm:$0x3]
    %v43 = vld [vmem:[#allocation2] sm:$0xff]
    %v44 = vld [vmem:[#allocation2 + $0x8] sm:$0xff]
    %v45 = vld [vmem:[#allocation2 + $0x10] sm:$0xff]
    %v46 = vld [vmem:[#allocation2 + $0x18] sm:$0xff]
    %v47 = vld [vmem:[#allocation2 + $0x20] sm:$0xff]
    %v48 = vld [vmem:[#allocation2 + $0x28] sm:$0xff]
    %v49 = vld [vmem:[#allocation2 + $0x30] sm:$0xff]
    %v50 = vld [vmem:[#allocation2 + $0x38] sm:$0xff]
    %v51 = vld [vmem:[#allocation2 + $0x40] sm:$0xff]
    %v52 = vld [vmem:[#allocation2 + $0x48] sm:$0xff]
    %v53 = vld [vmem:[#allocation2 + $0x50] sm:$0xff]
    %v54 = vld [vmem:[#allocation2 + $0x58] sm:$0xff]
    %v55 = vld [vmem:[#allocation2 + $0x60] sm:$0xff]
    %v56 = vld [vmem:[#allocation2 + $0x68] sm:$0xff]
    %v57 = vld [vmem:[#allocation2 + $0x70] sm:$0xff]
    %v58 = vld [vmem:[#allocation2 + $0x78] sm:$0xff]
    %59 = vmatpush.msra.mxu0 %v58
    %60 = vmatpush.msra.mxu0 %v57
    %61 = vmatpush.msra.mxu0 %v56
    %62 = vmatpush.msra.mxu0 %v55
    %63 = vmatpush.msra.mxu0 %v54
    %64 = vmatpush.msra.mxu0 %v53
    %65 = vmatpush.msra.mxu0 %v52
    %66 = vmatpush.msra.mxu0 %v51
    %67 = vmatpush.msra.mxu0 %v50
    %68 = vmatpush.msra.mxu0 %v49
    %69 = vmatpush.msra.mxu0 %v48
    %70 = vmatpush.msra.mxu0 %v47
    %71 = vmatpush.msra.mxu0 %v46
    %72 = vmatpush.msra.mxu0 %v45
    %73 = vmatpush.msra.mxu0 %v44
    %74 = vmatpush.msra.mxu0 %v43
    %75 = vmatmul.f32.gmra.mxu0 %v42
    %v76 = vpop.f32.mrf.mxu0
    %v77 = vadd.f32 0.0, %v76
    %78 = vdwg.mxu0
    %79 = vst [vmem:[#allocation7] sm:$0x3] %v77
    // Predicated region
    $region18: #{tpu_custom_call.1} parent=1 // pred_check
      _
    $region19: #{tpu_custom_call.1} parent=1 // pred_check_branch
      %81 = sbr.rel (0) target = $region21
    $region20: #{tpu_custom_call.1} parent=1 // pred_region
      %83 = vsyncadd [#allocation4], 0
      %s85 = sshll.u32 [#allocation7], 4
      %s86 = int_to_ptr.vmem [resolvable:$true] %s85
      %s87 = sshll.u32 %s2, 4
      %s88 = int_to_ptr.hbm [resolvable:$true] %s87
      %90 = dma.vmem_to_hbm [thread:$0]  %s86, 32, %s88, [#allocation4]
    $region21: #{tpu_custom_call.1} parent=1 // pred_fallthru
      _
    // Predicated region
    $region22: #{tpu_custom_call.1} parent=1 // pred_check
      _
    $region23: #{tpu_custom_call.1} parent=1 // pred_check_branch
      %92 = sbr.rel (0) target = $region25
    $region24: #{tpu_custom_call.1} parent=1 // pred_region
      %94 = dma.done [#allocation4], 32
    $region25: #{tpu_custom_call.1} parent=1 // pred_fallthru
      _
    %95 = vsyncpa [#allocation3], 1
    %96 = vsyncpa [#allocation6], 1
    %97 = vsyncpa [#allocation4], 1

</llo_original>
